<compile_context>
chip_gen: v7x
topology: tpu7x:2x2x1
jax: 0.10.0
libtpu: 0.0.40
codegen_flags: <defaults>
</compile_context>

<pallas_src>
import jax
import jax.numpy as jnp
from jax.experimental import pallas as pl
from jax.experimental.pallas import tpu as pltpu

_LANE = 128
_SUBLANE = 8


def _round_up(x, m):
    return ((x + m - 1) // m) * m


def _vmem_capacity_bytes():
    # Generation-aware VMEM capacity (128 MiB v5e/v6e, 64 MiB per-TC v7x).
    try:
        return int(pltpu.get_tpu_info().vmem_capacity_bytes)
    except Exception:
        return 64 * 1024 * 1024  # conservative (v7x-safe) fallback


def _make_mean_kernel(inv_b):
    def kernel(x_ref, o_ref, acc_ref):
        k = pl.program_id(1)  # reduction (B) axis, innermost grid axis

        @pl.when(k == 0)
        def _():
            acc_ref[...] = jnp.zeros_like(acc_ref)

        # f32 partial sum over the sublane axis of this (TB, TN) tile.
        # dtype=f32 keeps precision without materializing a full f32 copy
        # of a sub-32-bit tile first.
        acc_ref[...] += jnp.sum(x_ref[...], axis=0, keepdims=True,
                                dtype=jnp.float32)

        @pl.when(k == pl.num_programs(1) - 1)
        def _():
            o_ref[...] = (acc_ref[...] * inv_b).astype(o_ref.dtype)

    return kernel


def mean_module(x):
    """Equivalent of MeanModule.forward (mean over leading axis)."""
    trailing_shape = x.shape[1:]
    B = x.shape[0]
    x2 = x.reshape(B, -1)                        # (B, F)  -- glue reshape
    F = x2.shape[1]
    itemsize = jnp.dtype(x2.dtype).itemsize

    # ---- VMEM budget (generation-aware) --------------------------------
    vmem_cap = _vmem_capacity_bytes()
    budget = vmem_cap // 2                       # headroom for compiler scratch

    # ---- lane tile TN ---------------------------------------------------
    F_pad = max(_round_up(F, _LANE), _LANE)
    # Keep >= 4 grid steps along F when possible (>= 2 as fallback) so the
    # "parallel" axis can shard across both v7x TensorCores; cap at 2048
    # lanes (HBM roofline already saturated at 512-1024 lanes on v6e).
    if F_pad >= 8 * _LANE:
        tn_cap = (F_pad // (4 * _LANE)) * _LANE
    elif F_pad >= 2 * _LANE:
        tn_cap = (F_pad // (2 * _LANE)) * _LANE
    else:
        tn_cap = F_pad
    tn_cap = max(_LANE, min(2048, tn_cap))
    # Largest multiple of 128 <= tn_cap that divides F_pad exactly.
    m = F_pad // _LANE
    d = tn_cap // _LANE
    while d > 1 and m % d != 0:
        d -= 1
    TN = d * _LANE

    # ---- reduction tile TB (budget-driven) ------------------------------
    # Double-buffered (TB, TN) input block + double-buffered (1, TN) output
    # tile + f32 scratch must fit the budget.
    fixed_bytes = 2 * TN * itemsize + TN * 4
    row_bytes = TN * itemsize
    tb_max = max(_SUBLANE, (budget - fixed_bytes) // (2 * row_bytes))
    if tb_max >= B:
        TB = B                                   # full-extent block along B
        B_pad = B
    else:
        TB = max(_SUBLANE, (tb_max // _SUBLANE) * _SUBLANE)
        B_pad = _round_up(B, TB)

    # ---- zero-pad (zeros don't change the sum; we divide by the true B) --
    if (B_pad, F_pad) != (B, F):
        x2 = jnp.pad(x2, ((0, B_pad - B), (0, F_pad - F)))

    grid = (F_pad // TN, B_pad // TB)            # reduction axis last

    needed = 2 * TB * TN * itemsize + 2 * TN * itemsize + TN * 4
    vmem_limit_bytes = int(min(vmem_cap * 3 // 4,
                               max(needed + (4 << 20), 32 << 20)))

    cost = pl.CostEstimate(
        flops=int(B_pad) * int(F_pad),
        transcendentals=0,
        bytes_accessed=int(B_pad) * int(F_pad) * itemsize
                       + int(F_pad) * itemsize,
    )

    out2 = pl.pallas_call(
        _make_mean_kernel(1.0 / B),
        out_shape=jax.ShapeDtypeStruct((1, F_pad), x.dtype),
        grid=grid,
        in_specs=[pl.BlockSpec((TB, TN), lambda j, k: (k, j))],
        out_specs=pl.BlockSpec((1, TN), lambda j, k: (0, j)),
        scratch_shapes=[pltpu.VMEM((1, TN), jnp.float32)],
        compiler_params=pltpu.CompilerParams(
            dimension_semantics=("parallel", "arbitrary"),
            vmem_limit_bytes=vmem_limit_bytes),
        cost_estimate=cost,
    )(x2)

    out = out2[:, :F].reshape(trailing_shape)
    # Torch: if the result is 1-D, view it as (1, N). (Shapes are static.)
    if out.ndim == 1:
        out = out.reshape(1, out.shape[0])
    return out


if __name__ == "__main__":
    key = jax.random.PRNGKey(0)
    k1, k2 = jax.random.split(key)

    # Case 1: 2-D input (seq=8, hidden=32) -> mean over axis 0 is 1-D,
    # module reshapes it to (1, 32).
    x_2d = jax.random.normal(k1, (8, 32), dtype=jnp.float32)
    out_2d = jax.block_until_ready(mean_module(x_2d))
    ref_2d = jnp.mean(x_2d, axis=0).reshape(1, -1)
    assert out_2d.shape == (1, 32), out_2d.shape
    assert jnp.allclose(out_2d, ref_2d, atol=1e-5, rtol=1e-5)

    # Case 2: 4-D NCHW-style input (batch=2, channels=4, spatial=16x16)
    # -> mean over axis 0 stays 3-D, no reshape.
    x_4d = jax.random.normal(k2, (2, 4, 16, 16), dtype=jnp.float32)
    out_4d = jax.block_until_ready(mean_module(x_4d))
    ref_4d = jnp.mean(x_4d, axis=0)
    assert out_4d.shape == (4, 16, 16), out_4d.shape
    assert jnp.allclose(out_4d, ref_4d, atol=1e-5, rtol=1e-5)

    print("KERNEL_OK")
</pallas_src>

<mosaic_0001>
module attributes {stable_mosaic.version = 11 : i64} {
  func.func @kernel(%arg0: i32, %arg1: i32, %arg2: memref<8x128xf32, #tpu.memory_space<vmem>>, %arg3: memref<1x128xf32, #tpu.memory_space<vmem>>, %arg4: memref<1x128xf32, #tpu.memory_space<vmem>>) attributes {dimension_semantics = [#tpu.dimension_semantics<parallel>, #tpu.dimension_semantics<arbitrary>], iteration_bounds = array<i64: 1, 1>, scalar_prefetch = 0 : i64, scratch_operands = 1 : i64, tpu.core_type = #tpu.core_type<tc>, window_params = [{transform_indices = @transform_0, window_bounds = array<i64: 8, 128>}, {transform_indices = @transform_1, window_bounds = array<i64: 1, 128>}]} {
    %c0_i32 = arith.constant 0 : i32
    %0 = arith.cmpi eq, %arg1, %c0_i32 : i32
    %1 = arith.extui %0 : i1 to i32
    %c0_i32_0 = arith.constant 0 : i32
    %2 = arith.cmpi ne, %1, %c0_i32_0 : i32
    scf.if %2 {
      %cst_8 = arith.constant 0.000000e+00 : f32
      %12 = vector.broadcast %cst_8 : f32 to vector<1x128xf32>
      %c0_9 = arith.constant 0 : index
      %c0_10 = arith.constant 0 : index
      %13 = vector.load %arg4[%c0_9, %c0_10] : memref<1x128xf32, #tpu.memory_space<vmem>>, vector<1x128xf32>
      tpu.vector_store %arg4[%c0_9, %c0_10], %12 {strides = array<i32>} : memref<1x128xf32, #tpu.memory_space<vmem>>, vector<1x128xf32>,
    } else {
    }
    %c0 = arith.constant 0 : index
    %c0_1 = arith.constant 0 : index
    %3 = vector.load %arg4[%c0, %c0_1] : memref<1x128xf32, #tpu.memory_space<vmem>>, vector<1x128xf32>
    %c0_2 = arith.constant 0 : index
    %c0_3 = arith.constant 0 : index
    %4 = vector.load %arg2[%c0_2, %c0_3] : memref<8x128xf32, #tpu.memory_space<vmem>>, vector<8x128xf32>
    %cst = arith.constant dense<0.000000e+00> : vector<128xf32>
    %5 = vector.multi_reduction <add>, %4, %cst [0] : vector<8x128xf32> to vector<128xf32>
    %6 = vector.shape_cast %5 : vector<128xf32> to vector<1x128xf32>
    %7 = arith.addf %3, %6 : vector<1x128xf32>
    %c0_4 = arith.constant 0 : index
    %c0_5 = arith.constant 0 : index
    %8 = vector.load %arg4[%c0_4, %c0_5] : memref<1x128xf32, #tpu.memory_space<vmem>>, vector<1x128xf32>
    tpu.vector_store %arg4[%c0_4, %c0_5], %7 {strides = array<i32>} : memref<1x128xf32, #tpu.memory_space<vmem>>, vector<1x128xf32>,
    %c0_i32_6 = arith.constant 0 : i32
    %9 = arith.cmpi eq, %arg1, %c0_i32_6 : i32
    %10 = arith.extui %9 : i1 to i32
    %c0_i32_7 = arith.constant 0 : i32
    %11 = arith.cmpi ne, %10, %c0_i32_7 : i32
    scf.if %11 {
      %c0_8 = arith.constant 0 : index
      %c0_9 = arith.constant 0 : index
      %12 = vector.load %arg4[%c0_8, %c0_9] : memref<1x128xf32, #tpu.memory_space<vmem>>, vector<1x128xf32>
      %cst_10 = arith.constant 1.250000e-01 : f32
      %13 = vector.broadcast %cst_10 : f32 to vector<1x128xf32>
      %14 = arith.mulf %12, %13 : vector<1x128xf32>
      %c0_11 = arith.constant 0 : index
      %c0_12 = arith.constant 0 : index
      %15 = vector.load %arg3[%c0_11, %c0_12] : memref<1x128xf32, #tpu.memory_space<vmem>>, vector<1x128xf32>
      tpu.vector_store %arg3[%c0_11, %c0_12], %14 {strides = array<i32>} : memref<1x128xf32, #tpu.memory_space<vmem>>, vector<1x128xf32>,
    } else {
    }
    return
  }
  func.func @transform_0(%arg0: i32, %arg1: i32) -> (i32, i32) {
    %c0_i32 = arith.constant 0 : i32
    return %arg1, %arg0 : i32, i32
  }
  func.func @transform_1(%arg0: i32, %arg1: i32) -> (i32, i32) {
    %c0_i32 = arith.constant 0 : i32
    %c0_i32_0 = arith.constant 0 : i32
    return %c0_i32, %arg0 : i32, i32
  }
}

</mosaic_0001>

<llo_original>
// kernel: tpu_custom_call.1
$region0: #{tpu_custom_call.1}
  #allocation0 [shape = 'u32[]', space=smem, size = 0x4, offset = 0x4, fixed_abs, tag = 'smem constant byte address 0x4 - core index']
  #allocation1 [shape = 'u32[144,128]{1,0:T(1,128)}', space=vmem, size = 0x12000, scoped, tag = 'internal scratch']
  #allocation2 [shape = 'f32[1,128]{1,0:T(1,128)}', space=vmem, size = 0x200, scoped, tag = 'scratch operand']
  %s0 = inlined_call_operand.hbm [shape: f32[8,128], index: 0, kind: input, shape index: {}]
  %s1 = inlined_call_operand.hbm [shape: f32[1,128], index: 1, kind: output, shape index: {}]
  %s2 = sld [smem:[#allocation0]]
  $region26: #{tpu_custom_call.1} parent=0
    _
  %s4 = ssub.s32 1, %s2
  %s5 = scalar_select 0, %s4, %s2
  $region1: #{tpu_custom_call.1} parent=0
    #allocation3 [shape = 'u8[4096]{0}', space=vmem, size = 0x1000, scoped, tag = 'input window, operand 0, single buffered']
    #allocation4 [shape = 's32[1]{0}', space=sflag, size = 0x4, scoped, tag = 'scoped memory for tpu_custom_call.1']
    #allocation5 [shape = 's32[1]{0}', space=sflag, size = 0x4, scoped, tag = 'scoped memory for tpu_custom_call.1']
    #allocation6 [shape = 'u8[512]{0}', space=vmem, size = 0x400, scoped, tag = 'output window, operand 0, single buffered']
    %6 = vsyncpa [#allocation4], 0
    %7 = vsyncpa [#allocation5], 0
    // Predicated region
    $region2: #{tpu_custom_call.1} parent=1 // pred_check
      _
    $region3: #{tpu_custom_call.1} parent=1 // pred_check_branch
      %9 = sbr.rel (0) target = $region5
    $region4: #{tpu_custom_call.1} parent=1 // pred_region
      %s11 = ssub.s32 128, 128
      %12 = vsyncadd [#allocation4], %s11
      %s14 = sshll.u32 [#allocation3], 4
      %s15 = int_to_ptr.vmem [resolvable:$true] %s14
      %17 = dma.hbm_to_vmem [thread:$0]  %s0, 128, %s15, [#allocation4]
    $region5: #{tpu_custom_call.1} parent=1 // pred_fallthru
      _
    // Predicated region
    $region6: #{tpu_custom_call.1} parent=1 // pred_check
      _
    $region7: #{tpu_custom_call.1} parent=1 // pred_check_branch
      %19 = sbr.rel (0) target = $region9
    $region8: #{tpu_custom_call.1} parent=1 // pred_region
      %20 = dma.done [#allocation4], 128
    $region9: #{tpu_custom_call.1} parent=1 // pred_fallthru
      _
    %p21 = scmp.eq.s32.totalorder 0, 0
    // Predicated region
    $region10: #{tpu_custom_call.1} parent=1 // pred_check
      %p22 = pneg %p21
    $region11: #{tpu_custom_call.1} parent=1 // pred_check_branch
      %24 = sbr.rel (%p22) target = $region13
    $region12: #{tpu_custom_call.1} parent=1 // pred_region
      %25 = vst [vmem:[#allocation2] sm:$0x1] 0.0
    $region13: #{tpu_custom_call.1} parent=1 // pred_fallthru
      _
    %v26 = vld [vmem:[#allocation2] sm:$0x1]
    %v27 = vld [vmem:[#allocation3] sm:$0xff]
    %v28 = vrot.slane %v27, 4
    %v29 = vadd.f32 %v27, %v28
    %v30 = vrot.slane %v29, 2
    %v31 = vadd.f32 %v29, %v30
    %v32 = vrot.slane %v31, 1
    %v33 = vadd.f32 %v31, %v32
    %v34 = vadd.f32 %v26, %v33
    %35 = vst [vmem:[#allocation2] sm:$0x1] %v34
    // Predicated region
    $region14: #{tpu_custom_call.1} parent=1 // pred_check
      %p36 = pneg %p21
    $region15: #{tpu_custom_call.1} parent=1 // pred_check_branch
      %38 = sbr.rel (%p36) target = $region17
    $region16: #{tpu_custom_call.1} parent=1 // pred_region
      %v39 = vld [vmem:[#allocation2] sm:$0x1]
      %v40 = vmul.f32 %v39, 0.125
      %41 = vst [vmem:[#allocation6] sm:$0x1] %v40
    $region17: #{tpu_custom_call.1} parent=1 // pred_fallthru
      _
    // Predicated region
    $region18: #{tpu_custom_call.1} parent=1 // pred_check
      _
    $region19: #{tpu_custom_call.1} parent=1 // pred_check_branch
      %43 = sbr.rel (0) target = $region21
    $region20: #{tpu_custom_call.1} parent=1 // pred_region
      %s45 = ssub.s32 16, 16
      %46 = vsyncadd [#allocation5], %s45
      %s48 = sshll.u32 [#allocation6], 4
      %s49 = int_to_ptr.vmem [resolvable:$true] %s48
      %51 = dma.vmem_to_hbm [thread:$0]  %s49, 16, %s1, [#allocation5]
    $region21: #{tpu_custom_call.1} parent=1 // pred_fallthru
      _
    // Predicated region
    $region22: #{tpu_custom_call.1} parent=1 // pred_check
      _
    $region23: #{tpu_custom_call.1} parent=1 // pred_check_branch
      %53 = sbr.rel (0) target = $region25
    $region24: #{tpu_custom_call.1} parent=1 // pred_region
      %54 = dma.done [#allocation5], 16
    $region25: #{tpu_custom_call.1} parent=1 // pred_fallthru
      _
    %55 = vsyncpa [#allocation4], 1
    %56 = vsyncpa [#allocation5], 1

</llo_original>
